<compile_context>
chip_gen: v6e
topology: v6e:2x2x1
jax: 0.10.0
libtpu: 0.0.40
codegen_flags: <defaults>
</compile_context>

<pallas_src>
import functools

import jax
import jax.numpy as jnp
from jax.experimental import pallas as pl
from jax.experimental.pallas import tpu as pltpu

_LANE = 128


def _round_up(v: int, m: int) -> int:
    return ((v + m - 1) // m) * m


def _linear_bias_kernel(x_ref, w_ref, b_ref, o_ref):
    # One batch tile per grid step: MXU matmul (f32 acc) + bias add, one store.
    y = jnp.dot(x_ref[...], w_ref[...], preferred_element_type=jnp.float32)
    o_ref[...] = (y + b_ref[...]).astype(o_ref.dtype)


def _linear_nobias_kernel(x_ref, w_ref, o_ref):
    y = jnp.dot(x_ref[...], w_ref[...], preferred_element_type=jnp.float32)
    o_ref[...] = y.astype(o_ref.dtype)


def new_linear_forward(x, weight, bias=None, *, tile_b=512):
    """Pallas TPU implementation of newLinear.forward: y = x @ weight + bias.

    Args:
      x: (..., in_features) activations (any leading batch dims, like F.linear).
      weight: (in_features, out_features) — consumed directly, no transpose.
      bias: (out_features,) or None.
      tile_b: target rows per grid step (rounded to a sublane multiple; capped so
        the grid has >= 2 steps when the batch allows).

    Note: for repeated calls (e.g. inside a solver loop) the weight/bias padding
    and any dtype cast of `weight` should be hoisted out and done once by the
    caller; this wrapper does them per call for self-containment.
    """
    out_dtype = x.dtype
    d_in = x.shape[-1]
    assert weight.shape[0] == d_in, "weight must be (in_features, out_features)"
    d_out = weight.shape[1]

    # Flatten leading batch dims (F.linear semantics).
    lead_shape = x.shape[:-1]
    x2 = x.reshape(-1, d_in)
    b_rows = x2.shape[0]

    # One-time (ideally caller-side) weight dtype match; x is NOT cast per call.
    if weight.dtype != x2.dtype:
        weight = weight.astype(x2.dtype)

    # --- Lane-dense output: pad D_out up to a multiple of 128 with zero columns.
    d_out_p = _round_up(d_out, _LANE)
    if d_out_p != d_out:
        weight = jnp.pad(weight, ((0, 0), (0, d_out_p - d_out)))
    has_bias = bias is not None
    if has_bias:
        b_f32 = bias.astype(jnp.float32)
        if d_out_p != d_out:
            b_f32 = jnp.pad(b_f32, (0, d_out_p - d_out))
        b2d = b_f32.reshape(1, d_out_p)

    # --- Batch tiling: sublane-aligned tiles, >= 2 grid steps when possible.
    sub = 16 if jnp.dtype(x2.dtype).itemsize == 2 else 8
    if b_rows <= sub:
        tile_b = b_rows                       # tiny batch: one full block
    else:
        tile_b = max(sub, (min(int(tile_b), _round_up(b_rows, sub)) // sub) * sub)
        if pl.cdiv(b_rows, tile_b) < 2:       # keep both v7x TCs busy + pipeline
            tile_b = max(sub, _round_up(pl.cdiv(b_rows, 2), sub))
    grid = (pl.cdiv(b_rows, tile_b),)

    # --- VMEM budget (double-buffered x/out tiles + resident weight/bias).
    x_it = jnp.dtype(x2.dtype).itemsize
    w_it = jnp.dtype(weight.dtype).itemsize
    o_it = jnp.dtype(out_dtype).itemsize
    vmem_need = (2 * d_in * d_out_p * w_it          # weight (worst case: 2 bufs)
                 + 2 * d_out_p * 4                  # bias
                 + 2 * tile_b * d_in * x_it         # x double buffer
                 + 2 * tile_b * d_out_p * o_it)     # out double buffer
    vmem_limit = min(max(vmem_need + (8 << 20), 32 << 20), 100 << 20)
    # TODO(synk): single-buffer the grid-invariant weight/bias via
    # pipeline_mode=pl.Buffered(1), and add a D_out/K tiling path for weights
    # that don't fit v7x's 64 MiB VMEM; not needed at sodef's 64->64 shapes.

    x_spec = pl.BlockSpec((tile_b, d_in), lambda i: (i, 0))        # streamed tiles
    w_spec = pl.BlockSpec((d_in, d_out_p), lambda i: (0, 0))       # VMEM-resident
    o_spec = pl.BlockSpec((tile_b, d_out_p), lambda i: (i, 0))     # lane-dense store

    flops = 2 * b_rows * d_in * d_out_p
    bytes_accessed = (b_rows * d_in * x_it + d_in * d_out_p * w_it
                      + b_rows * d_out_p * o_it + (d_out_p * 4 if has_bias else 0))
    cost = pl.CostEstimate(flops=flops, transcendentals=0,
                           bytes_accessed=bytes_accessed)
    cparams = pltpu.CompilerParams(dimension_semantics=("parallel",),
                                   vmem_limit_bytes=int(vmem_limit))
    out_shape = jax.ShapeDtypeStruct((b_rows, d_out_p), out_dtype)

    if has_bias:
        b_spec = pl.BlockSpec((1, d_out_p), lambda i: (0, 0))      # VMEM-resident
        out = pl.pallas_call(
            _linear_bias_kernel,
            out_shape=out_shape,
            grid=grid,
            in_specs=[x_spec, w_spec, b_spec],
            out_specs=o_spec,
            compiler_params=cparams,
            cost_estimate=cost,
        )(x2, weight, b2d)
    else:
        out = pl.pallas_call(
            _linear_nobias_kernel,
            out_shape=out_shape,
            grid=grid,
            in_specs=[x_spec, w_spec],
            out_specs=o_spec,
            compiler_params=cparams,
            cost_estimate=cost,
        )(x2, weight)

    if d_out_p != d_out:
        out = out[:, :d_out]
    return out.reshape(lead_shape + (d_out,))


if __name__ == "__main__":
    key = jax.random.PRNGKey(0)
    k_x, k_w, k_b = jax.random.split(key, 3)

    # Small shapes consistent with the module's use in sodef (64 -> 64 features);
    # B=256 forces tile_b -> 128 so the grid has 2 pipelined / parallel steps,
    # and D_out=64 exercises the lane-padding (64 -> 128) path.
    B, D_IN, D_OUT = 256, 64, 64

    bound = 1.0 / float(D_IN) ** 0.5
    weight = jax.random.uniform(k_w, (D_IN, D_OUT), jnp.float32, -bound, bound)
    bias = jax.random.uniform(k_b, (D_OUT,), jnp.float32, -bound, bound)
    x = jax.random.normal(k_x, (B, D_IN), jnp.float32)

    # With bias.
    out = jax.block_until_ready(new_linear_forward(x, weight, bias))
    ref = jnp.dot(x, weight, precision=jax.lax.Precision.HIGHEST) + bias
    assert out.shape == (B, D_OUT)
    assert jnp.allclose(out, ref, atol=1e-4, rtol=1e-4), "mismatch vs reference (bias)"

    # Without bias (separate 2-input kernel, no synthetic zeros).
    out_nb = jax.block_until_ready(new_linear_forward(x, weight, None))
    ref_nb = jnp.dot(x, weight, precision=jax.lax.Precision.HIGHEST)
    assert jnp.allclose(out_nb, ref_nb, atol=1e-4, rtol=1e-4), "mismatch vs reference (no bias)"

    print("KERNEL_OK")
</pallas_src>

<mosaic_0001>
module attributes {stable_mosaic.version = 11 : i64} {
  func.func @_linear_bias_kernel(%arg0: i32, %arg1: memref<128x64xf32, #tpu.memory_space<vmem>>, %arg2: memref<64x128xf32, #tpu.memory_space<vmem>>, %arg3: memref<1x128xf32, #tpu.memory_space<vmem>>, %arg4: memref<128x128xf32, #tpu.memory_space<vmem>>) attributes {dimension_semantics = [#tpu.dimension_semantics<parallel>], iteration_bounds = array<i64: 2>, scalar_prefetch = 0 : i64, scratch_operands = 0 : i64, tpu.core_type = #tpu.core_type<tc>, window_params = [{transform_indices = @transform_0, window_bounds = array<i64: 128, 64>}, {pipeline_mode = #tpu.pipeline_mode<synchronous>, transform_indices = @transform_1, window_bounds = array<i64: 64, 128>}, {pipeline_mode = #tpu.pipeline_mode<synchronous>, transform_indices = @transform_2, window_bounds = array<i64: 1, 128>}, {transform_indices = @transform_3, window_bounds = array<i64: 128, 128>}]} {
    %c0 = arith.constant 0 : index
    %c0_0 = arith.constant 0 : index
    %0 = vector.load %arg1[%c0, %c0_0] : memref<128x64xf32, #tpu.memory_space<vmem>>, vector<128x64xf32>
    %c0_1 = arith.constant 0 : index
    %c0_2 = arith.constant 0 : index
    %1 = vector.load %arg2[%c0_1, %c0_2] : memref<64x128xf32, #tpu.memory_space<vmem>>, vector<64x128xf32>
    %cst = arith.constant dense<0.000000e+00> : vector<128x128xf32>
    %2 = tpu.matmul %0, %1, %cst {dimension_numbers = #tpu.dot_dimension_numbers<[1], [0], [0], [1], [0, 0, 1, 1], [], []>} : vector<128x64xf32>, vector<64x128xf32>, vector<128x128xf32> -> vector<128x128xf32>
    %c0_3 = arith.constant 0 : index
    %c0_4 = arith.constant 0 : index
    %3 = vector.load %arg3[%c0_3, %c0_4] : memref<1x128xf32, #tpu.memory_space<vmem>>, vector<1x128xf32>
    %4 = vector.broadcast %3 : vector<1x128xf32> to vector<128x128xf32>
    %5 = arith.addf %2, %4 : vector<128x128xf32>
    %c0_5 = arith.constant 0 : index
    %c0_6 = arith.constant 0 : index
    %6 = vector.load %arg4[%c0_5, %c0_6] : memref<128x128xf32, #tpu.memory_space<vmem>>, vector<128x128xf32>
    tpu.vector_store %arg4[%c0_5, %c0_6], %5 {strides = array<i32>} : memref<128x128xf32, #tpu.memory_space<vmem>>, vector<128x128xf32>,
    return
  }
  func.func @transform_0(%arg0: i32) -> (i32, i32) {
    %c0_i32 = arith.constant 0 : i32
    %c0_i32_0 = arith.constant 0 : i32
    return %arg0, %c0_i32 : i32, i32
  }
  func.func @transform_1(%arg0: i32) -> (i32, i32) {
    %c0_i32 = arith.constant 0 : i32
    %c0_i32_0 = arith.constant 0 : i32
    %c0_i32_1 = arith.constant 0 : i32
    return %c0_i32, %c0_i32_0 : i32, i32
  }
  func.func @transform_2(%arg0: i32) -> (i32, i32) {
    %c0_i32 = arith.constant 0 : i32
    %c0_i32_0 = arith.constant 0 : i32
    %c0_i32_1 = arith.constant 0 : i32
    return %c0_i32, %c0_i32_0 : i32, i32
  }
  func.func @transform_3(%arg0: i32) -> (i32, i32) {
    %c0_i32 = arith.constant 0 : i32
    %c0_i32_0 = arith.constant 0 : i32
    return %arg0, %c0_i32 : i32, i32
  }
}

</mosaic_0001>

<llo_original>
// kernel: tpu_custom_call.1
$region0: #{tpu_custom_call.1}
  #allocation0 [shape = 'u32[]', space=smem, size = 0x4, offset = 0x4, fixed_abs, tag = 'smem constant byte address 0x4 - core index']
  #allocation1 [shape = 'u32[144,128]{1,0:T(1,128)}', space=vmem, size = 0x12000, scoped, tag = 'internal scratch']
  %s0 = inlined_call_operand.vmem [shape: f32[256,64], index: 0, kind: input, shape index: {}]
  %s1 = inlined_call_operand.vmem [shape: f32[64,128], index: 1, kind: input, shape index: {}]
  %s2 = inlined_call_operand.vmem [shape: f32[1,128], index: 2, kind: input, shape index: {}]
  %s3 = inlined_call_operand.hbm [shape: f32[256,128], index: 3, kind: output, shape index: {}]
  %s4 = sld [smem:[#allocation0]]
  $region45: #{tpu_custom_call.1} parent=0
    _
  %s6 = ssub.s32 1, %s4
  %s7 = scalar_select 0, %s6, %s4
  $region1: #{tpu_custom_call.1} parent=0
    #allocation2 [shape = 'u8[131072]{0}', space=vmem, size = 0x20000, scoped, tag = 'output window, operand 0']
    #allocation3 [shape = 's32[2]{0}', space=sflag, size = 0x8, scoped, tag = 'scoped memory for tpu_custom_call.1']
    %8 = vsyncpa [#allocation3], 0
    %s9 = scalar_lea.sflag [#allocation3], 1
    %10 = vsyncpa %s9, 0
    loop: start=0, step=1, limit=4
    $region2: #{tpu_custom_call.1} parent=1 // loop_pre_header
      _
    $region3: #{tpu_custom_call.1} parent=1 // loop_header
      %s12 = sphi 0, %s16
      %p13 = scmp.ge.s32.totalorder %s12, 4
      %s22 = sphi 0, %s24
      %s25 = sphi 0, %s22
      %s26 = sphi 0, %s25
      %s42 = sphi 0, %s26
      %s46 = sphi 0, %s46
      %s48 = sphi 0, %s46
      %s49 = sphi 0, %s48
      %s63 = sphi 0, %s49
      %s67 = sphi 0, %s67
      %s69 = sphi 0, %s67
      %s70 = sphi 0, %s69
      %s84 = sphi 0, %s70
      %s90 = sphi 0, %s92
      %s93 = sphi 0, %s90
      %s94 = sphi 0, %s93
      %s110 = sphi 0, %s94
    $region4: #{tpu_custom_call.1} parent=1 // loop_header_branch
      %15 = sbr.rel (%p13) target = $region8
    $region5: #{tpu_custom_call.1} parent=1 // loop_body
      %s17 = ssub.s32 %s12, 1
      %s18 = ssub.s32 %s12, 2
      %s19 = sadd.s32 %s12, 1
      %s20 = ssub.s32 %s12, %s19
      %p21 = scmp.eq.s32.totalorder %s20, 0
      %s23 = sadd.s32 %s22, 1
      %s24 = scalar_select %p21, %s22, %s23
      %p27 = pneg %p21
      %p28 = scmp.eq.s32.totalorder %s12, 1
      %p29 = por %p27, %p28
      %p30 = scmp.ne.s32.totalorder %s22, %s25
      %p31 = scmp.eq.s32.totalorder %s12, 0
      %p32 = por %p30, %p31
      %p33 = scmp.ne.s32.totalorder %s22, %s25
      %p34 = scmp.eq.s32.totalorder %s17, 1
      %p35 = por %p33, %p34
      %p36 = scmp.ne.s32.totalorder %s25, %s26
      %p37 = scmp.eq.s32.totalorder %s17, 0
      %p38 = por %p36, %p37
      %p39 = scmp.ne.s32.totalorder %s25, %s26
      %p40 = scmp.eq.s32.totalorder %s18, 1
      %p41 = por %p39, %p40
      %p43 = scmp.ne.s32.totalorder %s26, %s42
      %p44 = scmp.eq.s32.totalorder %s18, 0
      %p45 = por %p43, %p44
      %s47 = sadd.s32 %s46, 1
      %p50 = scmp.eq.s32.totalorder %s12, 1
      %p51 = scmp.ne.s32.totalorder %s46, %s48
      %p52 = scmp.eq.s32.totalorder %s12, 0
      %p53 = por %p51, %p52
      %p54 = scmp.ne.s32.totalorder %s46, %s48
      %p55 = scmp.eq.s32.totalorder %s17, 1
      %p56 = por %p54, %p55
      %p57 = scmp.ne.s32.totalorder %s48, %s49
      %p58 = scmp.eq.s32.totalorder %s17, 0
      %p59 = por %p57, %p58
      %p60 = scmp.ne.s32.totalorder %s48, %s49
      %p61 = scmp.eq.s32.totalorder %s18, 1
      %p62 = por %p60, %p61
      %p64 = scmp.ne.s32.totalorder %s49, %s63
      %p65 = scmp.eq.s32.totalorder %s18, 0
      %p66 = por %p64, %p65
      %s68 = sadd.s32 %s67, 1
      %p71 = scmp.eq.s32.totalorder %s12, 1
      %p72 = scmp.ne.s32.totalorder %s67, %s69
      %p73 = scmp.eq.s32.totalorder %s12, 0
      %p74 = por %p72, %p73
      %p75 = scmp.ne.s32.totalorder %s67, %s69
      %p76 = scmp.eq.s32.totalorder %s17, 1
      %p77 = por %p75, %p76
      %p78 = scmp.ne.s32.totalorder %s69, %s70
      %p79 = scmp.eq.s32.totalorder %s17, 0
      %p80 = por %p78, %p79
      %p81 = scmp.ne.s32.totalorder %s69, %s70
      %p82 = scmp.eq.s32.totalorder %s18, 1
      %p83 = por %p81, %p82
      %p85 = scmp.ne.s32.totalorder %s70, %s84
      %p86 = scmp.eq.s32.totalorder %s18, 0
      %p87 = por %p85, %p86
      %s88 = ssub.s32 %s12, %s19
      %p89 = scmp.eq.s32.totalorder %s88, 0
      %s91 = sadd.s32 %s90, 1
      %s92 = scalar_select %p89, %s90, %s91
      %p95 = pneg %p89
      %p96 = scmp.eq.s32.totalorder %s12, 1
      %p97 = por %p95, %p96
      %p98 = scmp.ne.s32.totalorder %s90, %s93
      %p99 = scmp.eq.s32.totalorder %s12, 0
      %p100 = por %p98, %p99
      %p101 = scmp.ne.s32.totalorder %s90, %s93
      %p102 = scmp.eq.s32.totalorder %s17, 1
      %p103 = por %p101, %p102
      %p104 = scmp.ne.s32.totalorder %s93, %s94
      %p105 = scmp.eq.s32.totalorder %s17, 0
      %p106 = por %p104, %p105
      %p107 = scmp.ne.s32.totalorder %s93, %s94
      %p108 = scmp.eq.s32.totalorder %s18, 1
      %p109 = por %p107, %p108
      %p111 = scmp.ne.s32.totalorder %s94, %s110
      %p112 = scmp.eq.s32.totalorder %s18, 0
      %p113 = por %p111, %p112
      %p114 = scmp.le.s32.totalorder 1, %s12
      %p115 = scmp.lt.s32.totalorder %s12, 3
      %p116 = pnand %p114, %p115
      %p117 = pneg %p116
      // Predicated region
      $region9: #{tpu_custom_call.1} parent=5 // pred_check
        _
      $region10: #{tpu_custom_call.1} parent=5 // pred_check_branch
        %119 = sbr.rel (%p116) target = $region12
      $region11: #{tpu_custom_call.1} parent=5 // pred_region
        %s120 = ssub.s32 %s12, 1
        // Predicated region
        $region13: #{tpu_custom_call.1} parent=11 // pred_check
          %p121 = pneg %p59
        $region14: #{tpu_custom_call.1} parent=11 // pred_check_branch
          %123 = sbr.rel (%p121) target = $region16
        $region15: #{tpu_custom_call.1} parent=11 // pred_region
          _
        $region16: #{tpu_custom_call.1} parent=11 // pred_fallthru
          _
        // Predicated region
        $region17: #{tpu_custom_call.1} parent=11 // pred_check
          %p124 = pneg %p80
        $region18: #{tpu_custom_call.1} parent=11 // pred_check_branch
          %126 = sbr.rel (%p124) target = $region20
        $region19: #{tpu_custom_call.1} parent=11 // pred_region
          _
        $region20: #{tpu_custom_call.1} parent=11 // pred_fallthru
          _
      $region12: #{tpu_custom_call.1} parent=5 // pred_fallthru
        _
      %p127 = scmp.lt.s32.totalorder %s12, 2
      // Predicated region
      $region21: #{tpu_custom_call.1} parent=5 // pred_check
        %p128 = pneg %p127
      $region22: #{tpu_custom_call.1} parent=5 // pred_check_branch
        %130 = sbr.rel (%p128) target = $region24
      $region23: #{tpu_custom_call.1} parent=5 // pred_region
        // Predicated region
        $region25: #{tpu_custom_call.1} parent=23 // pred_check
          %p131 = pneg %p32
        $region26: #{tpu_custom_call.1} parent=23 // pred_check_branch
          %133 = sbr.rel (%p131) target = $region28
        $region27: #{tpu_custom_call.1} parent=23 // pred_region
          %s134 = smul.u32 16, %s12
          %p135 = scmp.lt.s32.totalorder %s134, 31
          %s136 = scalar_select %p135, %s134, 31
          %s137 = smul.addr %s136, 8
          %s138 = scalar_lea.vmem %s0, %s137
          %s139 = smul.u32 16, %s12
        $region28: #{tpu_custom_call.1} parent=23 // pred_fallthru
          _
      $region24: #{tpu_custom_call.1} parent=5 // pred_fallthru
        _
      %p140 = scmp.le.s32.totalorder 1, %s12
      %p141 = scmp.lt.s32.totalorder %s12, 3
      %p142 = pnand %p140, %p141
      %p143 = pneg %p142
      // Predicated region
      $region29: #{tpu_custom_call.1} parent=5 // pred_check
        _
      $region30: #{tpu_custom_call.1} parent=5 // pred_check_branch
        %145 = sbr.rel (%p142) target = $region32
      $region31: #{tpu_custom_call.1} parent=5 // pred_region
        %s146 = ssub.s32 %s12, 1
        %s147 = smul.u32 16, %s17
        %p148 = scmp.lt.s32.totalorder %s147, 31
        %s149 = scalar_select %p148, %s147, 31
        %s150 = smul.addr %s149, 8
        %s151 = scalar_lea.vmem %s0, %s150
        %p152 = pneg %p38
        %p153 = pneg %p35
        %p154 = pneg %p59
        %p155 = pneg %p56
        %p156 = pneg %p80
        %p157 = pneg %p77
        %p158 = pneg %p106
        %p159 = pneg %p103
        %s160 = sand.u32 %s93, 1
        %s161 = scalar_lea.sflag [#allocation3], %s160
        %s162 = sand.u32 %s93, 1
        %s163 = smul.addr %s162, 128
        %s164 = scalar_lea.vmem [#allocation2], %s163
        %s165 = smul.u32 16, %s17
        %p166 = scmp.lt.s32.totalorder %s165, 31
        %s167 = scalar_select %p166, %s165, 31
        %s168 = smul.addr %s167, 8
        %s169 = scalar_lea.vmem %s0, %s168
        %s170 = smul.u32 16, %s17
        %s171 = smul.u32 16, %s17
        %v172 = vld [vmem:[%s169] sm:$0xff]
        %v173 = vld [vmem:[%s169 + $0x8] sm:$0xff]
        %v174 = vld [vmem:[%s169 + $0x10] sm:$0xff]
        %v175 = vld [vmem:[%s169 + $0x18] sm:$0xff]
        %v176 = vld [vmem:[%s169 + $0x20] sm:$0xff]
        %v177 = vld [vmem:[%s169 + $0x28] sm:$0xff]
        %v178 = vld [vmem:[%s169 + $0x30] sm:$0xff]
        %v179 = vld [vmem:[%s169 + $0x38] sm:$0xff]
        %v180 = vld [vmem:[%s169 + $0x40] sm:$0xff]
        %v181 = vld [vmem:[%s169 + $0x48] sm:$0xff]
        %v182 = vld [vmem:[%s169 + $0x50] sm:$0xff]
        %v183 = vld [vmem:[%s169 + $0x58] sm:$0xff]
        %v184 = vld [vmem:[%s169 + $0x60] sm:$0xff]
        %v185 = vld [vmem:[%s169 + $0x68] sm:$0xff]
        %v186 = vld [vmem:[%s169 + $0x70] sm:$0xff]
        %v187 = vld [vmem:[%s169 + $0x78] sm:$0xff]
        %v188 = vld [vmem:[%s1] sm:$0xff]
        %v189 = vld [vmem:[%s1 + $0x8] sm:$0xff]
        %v190 = vld [vmem:[%s1 + $0x10] sm:$0xff]
        %v191 = vld [vmem:[%s1 + $0x18] sm:$0xff]
        %v192 = vld [vmem:[%s1 + $0x20] sm:$0xff]
        %v193 = vld [vmem:[%s1 + $0x28] sm:$0xff]
        %v194 = vld [vmem:[%s1 + $0x30] sm:$0xff]
        %v195 = vld [vmem:[%s1 + $0x38] sm:$0xff]
        %v196 = vld [vmem:[%s2] sm:$0x1]
        %v198 = vlaneseq
        %v199 = vshrl.u32 %v198, 7
        %v200 = vsub.s32 0, %v199
        %v201 = vrot.slane %v196, %v200
        %vm203 = vcmask 523264
        %v205 = vsel %vm203, %v172, 0
        %v208 = vsel %vm203, %v173, 0
        %v211 = vsel %vm203, %v174, 0
        %v214 = vsel %vm203, %v175, 0
        %v217 = vsel %vm203, %v176, 0
        %v220 = vsel %vm203, %v177, 0
        %v223 = vsel %vm203, %v178, 0
        %v226 = vsel %vm203, %v179, 0
        %v229 = vsel %vm203, %v180, 0
        %v232 = vsel %vm203, %v181, 0
        %v235 = vsel %vm203, %v182, 0
        %v238 = vsel %vm203, %v183, 0
        %v241 = vsel %vm203, %v184, 0
        %v244 = vsel %vm203, %v185, 0
        %v247 = vsel %vm203, %v186, 0
        %v250 = vsel %vm203, %v187, 0
        %252 = vmatprep.subr.mxu0 0.0
        %253 = vmatpush1.msra.mxu0 0.0
        %254 = vmatprep.subr.mxu0 0.0
        %255 = vmatpush1.msra.mxu0 0.0
        %256 = vmatprep.subr.mxu0 0.0
        %257 = vmatpush1.msra.mxu0 0.0
        %258 = vmatprep.subr.mxu0 0.0
        %259 = vmatpush1.msra.mxu0 0.0
        %260 = vmatprep.subr.mxu0 0.0
        %261 = vmatpush1.msra.mxu0 0.0
        %262 = vmatprep.subr.mxu0 0.0
        %263 = vmatpush1.msra.mxu0 0.0
        %264 = vmatprep.subr.mxu0 0.0
        %265 = vmatpush1.msra.mxu0 0.0
        %266 = vmatprep.subr.mxu0 0.0
        %267 = vmatpush1.msra.mxu0 0.0
        %268 = vmatprep.subr.mxu0 0.0
        %269 = vmatpush1.msra.mxu0 %v195
        %270 = vmatprep.subr.mxu0 0.0
        %271 = vmatpush1.msra.mxu0 %v194
        %272 = vmatprep.subr.mxu0 0.0
        %273 = vmatpush1.msra.mxu0 %v193
        %274 = vmatprep.subr.mxu0 0.0
        %275 = vmatpush1.msra.mxu0 %v192
        %276 = vmatprep.subr.mxu0 0.0
        %277 = vmatpush1.msra.mxu0 %v191
        %278 = vmatprep.subr.mxu0 0.0
        %279 = vmatpush1.msra.mxu0 %v190
        %280 = vmatprep.subr.mxu0 0.0
        %281 = vmatpush1.msra.mxu0 %v189
        %282 = vmatprep.subr.mxu0 0.0
        %283 = vmatpush1.msra.mxu0 %v188
        %284 = vmatprep.subr.mxu0 0.0
        %285 = vmatpush2.msra.mxu0 0.0
        %286 = vmatprep.subr.mxu0 0.0
        %287 = vmatpush2.msra.mxu0 0.0
        %288 = vmatprep.subr.mxu0 0.0
        %289 = vmatpush2.msra.mxu0 0.0
        %290 = vmatprep.subr.mxu0 0.0
        %291 = vmatpush2.msra.mxu0 0.0
        %292 = vmatprep.subr.mxu0 0.0
        %293 = vmatpush2.msra.mxu0 0.0
        %294 = vmatprep.subr.mxu0 0.0
        %295 = vmatpush2.msra.mxu0 0.0
        %296 = vmatprep.subr.mxu0 0.0
        %297 = vmatpush2.msra.mxu0 0.0
        %298 = vmatprep.subr.mxu0 0.0
        %299 = vmatpush2.msra.mxu0 0.0
        %300 = vmatprep.subr.mxu0 0.0
        %301 = vmatpush2.msra.mxu0 0.0
        %302 = vmatprep.subr.mxu0 0.0
        %303 = vmatpush2.msra.mxu0 0.0
        %304 = vmatprep.subr.mxu0 0.0
        %305 = vmatpush2.msra.mxu0 0.0
        %306 = vmatprep.subr.mxu0 0.0
        %307 = vmatpush2.msra.mxu0 0.0
        %308 = vmatprep.subr.mxu0 0.0
        %309 = vmatpush2.msra.mxu0 0.0
        %310 = vmatprep.subr.mxu0 0.0
        %311 = vmatpush2.msra.mxu0 0.0
        %312 = vmatprep.subr.mxu0 0.0
        %313 = vmatpush2.msra.mxu0 0.0
        %314 = vmatprep.subr.mxu0 0.0
        %315 = vmatpush2.msra.mxu0 0.0
        %316 = vmatprep.mubr.f32.mxu0 0.0
        %317 = vmatmul.mubr.f32.gmra.mxu0 %v205
        %v318 = vpop.f32.mrf.mxu0
        %v319 = vadd.f32 %v201, %v318
        %v320 = vpop.f32.mrf.mxu0
        %321 = vmatprep.mubr.f32.mxu0 0.0
        %322 = vmatmul.mubr.f32.gmra.mxu0 %v208
        %v323 = vpop.f32.mrf.mxu0
        %v324 = vadd.f32 %v201, %v323
        %v325 = vpop.f32.mrf.mxu0
        %326 = vmatprep.mubr.f32.mxu0 0.0
        %327 = vmatmul.mubr.f32.gmra.mxu0 %v211
        %v328 = vpop.f32.mrf.mxu0
        %v329 = vadd.f32 %v201, %v328
        %v330 = vpop.f32.mrf.mxu0
        %331 = vmatprep.mubr.f32.mxu0 0.0
        %332 = vmatmul.mubr.f32.gmra.mxu0 %v214
        %v333 = vpop.f32.mrf.mxu0
        %v334 = vadd.f32 %v201, %v333
        %v335 = vpop.f32.mrf.mxu0
        %336 = vmatprep.mubr.f32.mxu0 0.0
        %337 = vmatmul.mubr.f32.gmra.mxu0 %v217
        %v338 = vpop.f32.mrf.mxu0
        %v339 = vadd.f32 %v201, %v338
        %v340 = vpop.f32.mrf.mxu0
        %341 = vmatprep.mubr.f32.mxu0 0.0
        %342 = vmatmul.mubr.f32.gmra.mxu0 %v220
        %v343 = vpop.f32.mrf.mxu0
        %v344 = vadd.f32 %v201, %v343
        %v345 = vpop.f32.mrf.mxu0
        %346 = vmatprep.mubr.f32.mxu0 0.0
        %347 = vmatmul.mubr.f32.gmra.mxu0 %v223
        %v348 = vpop.f32.mrf.mxu0
        %v349 = vadd.f32 %v201, %v348
        %v350 = vpop.f32.mrf.mxu0
        %351 = vmatprep.mubr.f32.mxu0 0.0
        %352 = vmatmul.mubr.f32.gmra.mxu0 %v226
        %v353 = vpop.f32.mrf.mxu0
        %v354 = vadd.f32 %v201, %v353
        %v355 = vpop.f32.mrf.mxu0
        %356 = vmatprep.mubr.f32.mxu0 0.0
        %357 = vmatmul.mubr.f32.gmra.mxu0 %v229
        %v358 = vpop.f32.mrf.mxu0
        %v359 = vadd.f32 %v201, %v358
        %v360 = vpop.f32.mrf.mxu0
        %361 = vmatprep.mubr.f32.mxu0 0.0
        %362 = vmatmul.mubr.f32.gmra.mxu0 %v232
        %v363 = vpop.f32.mrf.mxu0
        %v364 = vadd.f32 %v201, %v363
        %v365 = vpop.f32.mrf.mxu0
        %366 = vmatprep.mubr.f32.mxu0 0.0
        %367 = vmatmul.mubr.f32.gmra.mxu0 %v235
        %v368 = vpop.f32.mrf.mxu0
        %v369 = vadd.f32 %v201, %v368
        %v370 = vpop.f32.mrf.mxu0
        %371 = vmatprep.mubr.f32.mxu0 0.0
        %372 = vmatmul.mubr.f32.gmra.mxu0 %v238
        %v373 = vpop.f32.mrf.mxu0
        %v374 = vadd.f32 %v201, %v373
        %v375 = vpop.f32.mrf.mxu0
        %376 = vmatprep.mubr.f32.mxu0 0.0
        %377 = vmatmul.mubr.f32.gmra.mxu0 %v241
        %v378 = vpop.f32.mrf.mxu0
        %v379 = vadd.f32 %v201, %v378
        %v380 = vpop.f32.mrf.mxu0
        %381 = vmatprep.mubr.f32.mxu0 0.0
        %382 = vmatmul.mubr.f32.gmra.mxu0 %v244
        %v383 = vpop.f32.mrf.mxu0
        %v384 = vadd.f32 %v201, %v383
        %v385 = vpop.f32.mrf.mxu0
        %386 = vmatprep.mubr.f32.mxu0 0.0
        %387 = vmatmul.mubr.f32.gmra.mxu0 %v247
        %v388 = vpop.f32.mrf.mxu0
        %v389 = vadd.f32 %v201, %v388
        %v390 = vpop.f32.mrf.mxu0
        %391 = vmatprep.mubr.f32.mxu0 0.0
        %392 = vmatmul.mubr.f32.gmra.mxu0 %v250
        %v393 = vpop.f32.mrf.mxu0
        %v394 = vadd.f32 %v201, %v393
        %v395 = vpop.f32.mrf.mxu0
        %396 = vdwg.mxu0
        %397 = vst [vmem:[%s164] sm:$0xff] %v319
        %398 = vst [vmem:[%s164 + $0x8] sm:$0xff] %v324
        %399 = vst [vmem:[%s164 + $0x10] sm:$0xff] %v329
        %400 = vst [vmem:[%s164 + $0x18] sm:$0xff] %v334
        %401 = vst [vmem:[%s164 + $0x20] sm:$0xff] %v339
        %402 = vst [vmem:[%s164 + $0x28] sm:$0xff] %v344
        %403 = vst [vmem:[%s164 + $0x30] sm:$0xff] %v349
        %404 = vst [vmem:[%s164 + $0x38] sm:$0xff] %v354
        %405 = vst [vmem:[%s164 + $0x40] sm:$0xff] %v359
        %406 = vst [vmem:[%s164 + $0x48] sm:$0xff] %v364
        %407 = vst [vmem:[%s164 + $0x50] sm:$0xff] %v369
        %408 = vst [vmem:[%s164 + $0x58] sm:$0xff] %v374
        %409 = vst [vmem:[%s164 + $0x60] sm:$0xff] %v379
        %410 = vst [vmem:[%s164 + $0x68] sm:$0xff] %v384
        %411 = vst [vmem:[%s164 + $0x70] sm:$0xff] %v389
        %412 = vst [vmem:[%s164 + $0x78] sm:$0xff] %v394
        %s413 = sand.u32 %s93, 1
        %s414 = scalar_lea.sflag [#allocation3], %s413
        %s415 = sand.u32 %s93, 1
        %s416 = smul.addr %s415, 128
        %s417 = scalar_lea.vmem [#allocation2], %s416
        // Predicated region
        $region33: #{tpu_custom_call.1} parent=31 // pred_check
          %p418 = pneg %p103
        $region34: #{tpu_custom_call.1} parent=31 // pred_check_branch
          %420 = sbr.rel (%p418) target = $region36
        $region35: #{tpu_custom_call.1} parent=31 // pred_region
          %s421 = smul.u32 16, %s17
          %s423 = ssub.s32 2048, 2048
          %424 = vsyncadd %s414, %s423
          %s425 = smul.addr %s421, 128
          %s426 = scalar_lea.hbm %s3, %s425
          %s427 = sshll.u32 %s417, 4
          %s428 = int_to_ptr.vmem [resolvable:$true] %s427
          %433 = dma.vmem_to_hbm [thread:$0]  %s428, 2048, %s426, %s414, 128, 128, 8
        $region36: #{tpu_custom_call.1} parent=31 // pred_fallthru
          _
      $region32: #{tpu_custom_call.1} parent=5 // pred_fallthru
        _
      %p434 = scmp.le.s32.totalorder 2, %s12
      // Predicated region
      $region37: #{tpu_custom_call.1} parent=5 // pred_check
        %p435 = pneg %p434
      $region38: #{tpu_custom_call.1} parent=5 // pred_check_branch
        %437 = sbr.rel (%p435) target = $region40
      $region39: #{tpu_custom_call.1} parent=5 // pred_region
        %s438 = ssub.s32 %s12, 2
        // Predicated region
        $region41: #{tpu_custom_call.1} parent=39 // pred_check
          %p439 = pneg %p109
        $region42: #{tpu_custom_call.1} parent=39 // pred_check_branch
          %441 = sbr.rel (%p439) target = $region44
        $region43: #{tpu_custom_call.1} parent=39 // pred_region
          %s442 = sand.u32 %s94, 1
          %s443 = scalar_lea.sflag [#allocation3], %s442
          %s444 = sand.u32 %s94, 1
          %s445 = smul.addr %s444, 128
          %s446 = scalar_lea.vmem [#allocation2], %s445
          %447 = dma.done %s443, 2048
        $region44: #{tpu_custom_call.1} parent=39 // pred_fallthru
          _
      $region40: #{tpu_custom_call.1} parent=5 // pred_fallthru
        _
    $region6: #{tpu_custom_call.1} parent=1 // loop_footer
      %s16 = sadd.s32 1, %s12
    $region7: #{tpu_custom_call.1} parent=1 // loop_footer_branch
      %11 = sbr.rel target = $region3
    $region8: #{tpu_custom_call.1} parent=1 // loop_exit
      _
    %448 = vsyncpa [#allocation3], 1
    %s449 = scalar_lea.sflag [#allocation3], 1
    %450 = vsyncpa %s449, 1

</llo_original>
